<compile_context>
chip_gen: v7x
topology: tpu7x:2x2x1
jax: 0.10.0
libtpu: 0.0.40
codegen_flags: <defaults>
</compile_context>

<pallas_src>
import jax
import jax.numpy as jnp
from jax import lax
from jax.experimental import pallas as pl
from jax.experimental.pallas import tpu as pltpu


def _round_up(n, m):
    return ((n + m - 1) // m) * m


def _default_batch_tile(B, cap=4096):
    """Largest tile (multiple of 128, <= cap) that gives an even tile count for B > 256."""
    if B <= 256:
        return _round_up(B, 128)          # single small tile; per-step overhead dominates anyway
    nt = 2                                # even tile count -> balanced v7x megacore split
    while _round_up(pl.cdiv(B, nt), 128) > cap:
        nt += 2
    return _round_up(pl.cdiv(B, nt), 128)


def reward_mlp_kernel(x_ref, w1_ref, b1_ref, w2_ref, b2_ref, w3_ref, b3_ref, o_ref):
    """One batch tile of the fused 3-layer MLP, entirely in VMEM."""
    # Cast x to the MXU operand dtype inside VMEM (x streams from HBM in its original
    # dtype -> no extra wrapper-side HBM pass when compute dtype != x dtype).
    x = x_ref[...].astype(w1_ref.dtype)                          # (tb, D)

    b1 = b1_ref[...]                                             # (1, H1) f32
    b2 = b2_ref[...]                                             # (1, H2) f32
    b3 = b3_ref[0]                                               # scalar (SMEM)

    # Layers 1-2: MXU matmuls with f32 accumulation; bias + ReLU on the f32 VPU path.
    h1 = jnp.dot(x, w1_ref[...], preferred_element_type=jnp.float32) + b1
    h1 = jnp.maximum(h1, 0.0)
    h2 = jnp.dot(h1.astype(w2_ref.dtype), w2_ref[...],
                 preferred_element_type=jnp.float32) + b2
    h2 = jnp.maximum(h2, 0.0)

    # Layer 3 (out_features == 1): contract (1,H2) with (tb,H2) along H2 on the MXU.
    # The (1, tb) result is already lane-dense, so the store is an unmasked vst.
    y = lax.dot_general(w3_ref[...], h2.astype(w3_ref.dtype),
                        (((1,), (1,)), ((), ())),
                        preferred_element_type=jnp.float32)       # (1, tb)
    o_ref[...] = (y + b3).astype(o_ref.dtype)


def reward_network_forward(x, params, *, batch_tile=None, compute_dtype=jnp.bfloat16):
    """x: (B, input_dim). params: dict of (in,out)-layout weights/biases (see init_params).

    Returns (B, 1) float32, matching RewardNetwork.forward semantics.
    """
    B, D = x.shape
    H1 = params["w1"].shape[1]   # 128
    H2 = params["w2"].shape[1]   # 128
    compute_dtype = jnp.dtype(compute_dtype) if compute_dtype is not None else x.dtype

    # Weights are cast once in the wrapper (tiny, one-time). Biases stay f32 so the
    # elementwise work stays on the f32 VPU path (v5e VPU has no native bf16).
    w1 = params["w1"].astype(compute_dtype)
    w2 = params["w2"].astype(compute_dtype)
    w3 = params["w3"].reshape(1, H2).astype(compute_dtype)        # (H2, 1) -> (1, H2) row
    b1 = params["b1"].reshape(1, H1).astype(jnp.float32)
    b2 = params["b2"].reshape(1, H2).astype(jnp.float32)
    b3 = params["b3"].reshape(1).astype(jnp.float32)              # scalar, lives in SMEM

    tb = batch_tile if batch_tile is not None else _default_batch_tile(B)
    assert tb % 128 == 0, "batch_tile must be a multiple of 128 (lane-dense output)"
    # No wrapper pad: Pallas handles the ragged last block (rows are independent,
    # garbage edge rows only affect their own discarded output lanes).
    num_tiles = pl.cdiv(B, tb)

    # Rough VMEM estimate; only override the default scoped limit when actually needed
    # (v5e's default is 16 MiB). Cap well below v7x's 64 MiB physical VMEM.
    ci = compute_dtype.itemsize
    vmem_est = (2 * tb * D * x.dtype.itemsize            # double-buffered x tiles
                + 2 * tb * 4                             # double-buffered (1, tb) output
                + tb * (H1 + H2) * 4                     # f32 h1 / h2 temporaries
                + tb * (D + H1 + H2) * ci                # in-kernel MXU-operand casts
                + 2 * (D * H1 + H1 * H2 + H2) * ci       # resident weights (buffered)
                + (H1 + H2) * 4)
    vmem_limit = None
    if vmem_est > 12 * 1024 * 1024:
        vmem_limit = min(int(1.5 * vmem_est) + (4 << 20), 48 << 20)

    out = pl.pallas_call(
        reward_mlp_kernel,
        out_shape=jax.ShapeDtypeStruct((1, B), jnp.float32),
        grid_spec=pltpu.PrefetchScalarGridSpec(
            num_scalar_prefetch=0,
            grid=(num_tiles,),
            in_specs=[
                pl.BlockSpec((tb, D), lambda i: (i, 0)),            # x tile (streamed)
                pl.BlockSpec((D, H1), lambda i: (0, 0)),            # w1 (resident)
                pl.BlockSpec((1, H1), lambda i: (0, 0)),            # b1
                pl.BlockSpec((H1, H2), lambda i: (0, 0)),           # w2
                pl.BlockSpec((1, H2), lambda i: (0, 0)),            # b2
                pl.BlockSpec((1, H2), lambda i: (0, 0)),            # w3 as a row
                pl.BlockSpec(memory_space=pltpu.MemorySpace.SMEM),  # b3 scalar
            ],
            out_specs=pl.BlockSpec((1, tb), lambda i: (0, i)),      # lane-dense blocks
        ),
        compiler_params=pltpu.CompilerParams(
            dimension_semantics=("parallel",),
            vmem_limit_bytes=vmem_limit,
        ),
    )(x, w1, b1, w2, b2, w3, b3)

    return out.reshape(B, 1)


def init_params(key, input_dim, h1=128, h2=128, out=1):
    """Deterministic synthetic init (uniform, roughly like PyTorch Linear default scale)."""
    k1, k2, k3, k4, k5, k6 = jax.random.split(key, 6)

    def u(k, shape, fan_in):
        bound = 1.0 / jnp.sqrt(fan_in)
        return jax.random.uniform(k, shape, jnp.float32, -bound, bound)

    return {
        "w1": u(k1, (input_dim, h1), input_dim),
        "b1": u(k2, (1, h1), input_dim),
        "w2": u(k3, (h1, h2), h1),
        "b2": u(k4, (1, h2), h1),
        "w3": u(k5, (h2, out), h2),
        "b3": u(k6, (1, out), h2),
    }


def reference_forward(x, p):
    h1 = jnp.maximum(x @ p["w1"] + p["b1"], 0.0)
    h2 = jnp.maximum(h1 @ p["w2"] + p["b2"], 0.0)
    return h2 @ p["w3"] + p["b3"]


if __name__ == "__main__":
    key = jax.random.PRNGKey(0)
    kx, kx2, kp = jax.random.split(key, 3)

    # Small shapes consistent with the module (single-tile, ragged edge block).
    batch, input_dim = 8, 32
    x = jax.random.normal(kx, (batch, input_dim), jnp.float32)
    params = init_params(kp, input_dim)
    ref = reference_forward(x, params)

    # Default path: bf16 MXU operands with f32 accumulation (loose tolerance).
    out = jax.block_until_ready(reward_network_forward(x, params))
    assert out.shape == (batch, 1)
    assert jnp.allclose(out, ref, atol=5e-2, rtol=5e-2), "bf16 default path mismatch"

    # f32 MXU operands: tight check vs the JAX reference.
    out_f32 = jax.block_until_ready(
        reward_network_forward(x, params, compute_dtype=jnp.float32))
    assert jnp.allclose(out_f32, ref, atol=1e-4, rtol=1e-4), "f32 mismatch vs reference"

    # Multi-tile ragged batch (3 grid steps, unpadded x, partial last block).
    batch2 = 300
    x2 = jax.random.normal(kx2, (batch2, input_dim), jnp.float32)
    ref2 = reference_forward(x2, params)
    out2 = jax.block_until_ready(
        reward_network_forward(x2, params, batch_tile=128, compute_dtype=jnp.float32))
    assert out2.shape == (batch2, 1)
    assert jnp.allclose(out2, ref2, atol=1e-4, rtol=1e-4), "tiled f32 mismatch"

    # Default tile selection (even split for v7x) on the ragged batch, bf16 default.
    out2b = jax.block_until_ready(reward_network_forward(x2, params))
    assert out2b.shape == (batch2, 1)
    assert jnp.allclose(out2b, ref2, atol=5e-2, rtol=5e-2), "default-tile bf16 mismatch"

    print("KERNEL_OK")
</pallas_src>

<mosaic_0001>
module attributes {stable_mosaic.version = 11 : i64} {
  func.func @reward_mlp_kernel(%arg0: i32, %arg1: memref<128x32xf32, #tpu.memory_space<vmem>>, %arg2: memref<32x128xbf16, #tpu.memory_space<vmem>>, %arg3: memref<1x128xf32, #tpu.memory_space<vmem>>, %arg4: memref<128x128xbf16, #tpu.memory_space<vmem>>, %arg5: memref<1x128xf32, #tpu.memory_space<vmem>>, %arg6: memref<1x128xbf16, #tpu.memory_space<vmem>>, %arg7: memref<1xf32, #tpu.memory_space<smem>>, %arg8: memref<1x128xf32, #tpu.memory_space<vmem>>) attributes {dimension_semantics = [#tpu.dimension_semantics<parallel>], iteration_bounds = array<i64: 1>, scalar_prefetch = 0 : i64, scratch_operands = 0 : i64, tpu.core_type = #tpu.core_type<tc>, window_params = [{transform_indices = @transform_0, window_bounds = array<i64: 128, 32>}, {pipeline_mode = #tpu.pipeline_mode<synchronous>, transform_indices = @transform_1, window_bounds = array<i64: 32, 128>}, {pipeline_mode = #tpu.pipeline_mode<synchronous>, transform_indices = @transform_2, window_bounds = array<i64: 1, 128>}, {pipeline_mode = #tpu.pipeline_mode<synchronous>, transform_indices = @transform_3, window_bounds = array<i64: 128, 128>}, {pipeline_mode = #tpu.pipeline_mode<synchronous>, transform_indices = @transform_4, window_bounds = array<i64: 1, 128>}, {pipeline_mode = #tpu.pipeline_mode<synchronous>, transform_indices = @transform_5, window_bounds = array<i64: 1, 128>}, {transform_indices = @transform_6, window_bounds = array<i64: 1>}, {transform_indices = @transform_7, window_bounds = array<i64: 1, 128>}]} {
    %c0 = arith.constant 0 : index
    %c0_0 = arith.constant 0 : index
    %0 = vector.load %arg1[%c0, %c0_0] : memref<128x32xf32, #tpu.memory_space<vmem>>, vector<128x32xf32>
    %1 = arith.truncf %0 : vector<128x32xf32> to vector<128x32xbf16>
    %c0_1 = arith.constant 0 : index
    %c0_2 = arith.constant 0 : index
    %2 = vector.load %arg3[%c0_1, %c0_2] : memref<1x128xf32, #tpu.memory_space<vmem>>, vector<1x128xf32>
    %c0_3 = arith.constant 0 : index
    %c0_4 = arith.constant 0 : index
    %3 = vector.load %arg5[%c0_3, %c0_4] : memref<1x128xf32, #tpu.memory_space<vmem>>, vector<1x128xf32>
    %c0_5 = arith.constant 0 : index
    %4 = memref.load %arg7[%c0_5] : memref<1xf32, #tpu.memory_space<smem>>
    %c0_6 = arith.constant 0 : index
    %c0_7 = arith.constant 0 : index
    %5 = vector.load %arg2[%c0_6, %c0_7] : memref<32x128xbf16, #tpu.memory_space<vmem>>, vector<32x128xbf16>
    %cst = arith.constant dense<0.000000e+00> : vector<128x128xf32>
    %6 = tpu.matmul %1, %5, %cst {dimension_numbers = #tpu.dot_dimension_numbers<[1], [0], [0], [1], [0, 0, 1, 1], [], []>} : vector<128x32xbf16>, vector<32x128xbf16>, vector<128x128xf32> -> vector<128x128xf32>
    %7 = vector.broadcast %2 : vector<1x128xf32> to vector<128x128xf32>
    %8 = arith.addf %6, %7 : vector<128x128xf32>
    %cst_8 = arith.constant 0.000000e+00 : f32
    %9 = vector.broadcast %cst_8 : f32 to vector<128x128xf32>
    %10 = arith.maximumf %8, %9 : vector<128x128xf32>
    %11 = arith.truncf %10 : vector<128x128xf32> to vector<128x128xbf16>
    %c0_9 = arith.constant 0 : index
    %c0_10 = arith.constant 0 : index
    %12 = vector.load %arg4[%c0_9, %c0_10] : memref<128x128xbf16, #tpu.memory_space<vmem>>, vector<128x128xbf16>
    %cst_11 = arith.constant dense<0.000000e+00> : vector<128x128xf32>
    %13 = tpu.matmul %11, %12, %cst_11 {dimension_numbers = #tpu.dot_dimension_numbers<[1], [0], [0], [1], [0, 0, 1, 1], [], []>} : vector<128x128xbf16>, vector<128x128xbf16>, vector<128x128xf32> -> vector<128x128xf32>
    %14 = vector.broadcast %3 : vector<1x128xf32> to vector<128x128xf32>
    %15 = arith.addf %13, %14 : vector<128x128xf32>
    %cst_12 = arith.constant 0.000000e+00 : f32
    %16 = vector.broadcast %cst_12 : f32 to vector<128x128xf32>
    %17 = arith.maximumf %15, %16 : vector<128x128xf32>
    %c0_13 = arith.constant 0 : index
    %c0_14 = arith.constant 0 : index
    %18 = vector.load %arg6[%c0_13, %c0_14] : memref<1x128xbf16, #tpu.memory_space<vmem>>, vector<1x128xbf16>
    %19 = arith.truncf %17 : vector<128x128xf32> to vector<128x128xbf16>
    %cst_15 = arith.constant dense<0.000000e+00> : vector<1x128xf32>
    %20 = tpu.matmul %18, %19, %cst_15 {dimension_numbers = #tpu.dot_dimension_numbers<[1], [1], [0], [0], [0, 0, 1, 0], [], []>} : vector<1x128xbf16>, vector<128x128xbf16>, vector<1x128xf32> -> vector<1x128xf32>
    %21 = vector.broadcast %4 : f32 to vector<1x128xf32>
    %22 = arith.addf %20, %21 : vector<1x128xf32>
    %c0_16 = arith.constant 0 : index
    %c0_17 = arith.constant 0 : index
    %23 = vector.load %arg8[%c0_16, %c0_17] : memref<1x128xf32, #tpu.memory_space<vmem>>, vector<1x128xf32>
    tpu.vector_store %arg8[%c0_16, %c0_17], %22 {strides = array<i32>} : memref<1x128xf32, #tpu.memory_space<vmem>>, vector<1x128xf32>,
    return
  }
  func.func @transform_0(%arg0: i32) -> (i32, i32) {
    %c0_i32 = arith.constant 0 : i32
    %c0_i32_0 = arith.constant 0 : i32
    return %arg0, %c0_i32 : i32, i32
  }
  func.func @transform_1(%arg0: i32) -> (i32, i32) {
    %c0_i32 = arith.constant 0 : i32
    %c0_i32_0 = arith.constant 0 : i32
    %c0_i32_1 = arith.constant 0 : i32
    return %c0_i32, %c0_i32_0 : i32, i32
  }
  func.func @transform_2(%arg0: i32) -> (i32, i32) {
    %c0_i32 = arith.constant 0 : i32
    %c0_i32_0 = arith.constant 0 : i32
    %c0_i32_1 = arith.constant 0 : i32
    return %c0_i32, %c0_i32_0 : i32, i32
  }
  func.func @transform_3(%arg0: i32) -> (i32, i32) {
    %c0_i32 = arith.constant 0 : i32
    %c0_i32_0 = arith.constant 0 : i32
    %c0_i32_1 = arith.constant 0 : i32
    return %c0_i32, %c0_i32_0 : i32, i32
  }
  func.func @transform_4(%arg0: i32) -> (i32, i32) {
    %c0_i32 = arith.constant 0 : i32
    %c0_i32_0 = arith.constant 0 : i32
    %c0_i32_1 = arith.constant 0 : i32
    return %c0_i32, %c0_i32_0 : i32, i32
  }
  func.func @transform_5(%arg0: i32) -> (i32, i32) {
    %c0_i32 = arith.constant 0 : i32
    %c0_i32_0 = arith.constant 0 : i32
    %c0_i32_1 = arith.constant 0 : i32
    return %c0_i32, %c0_i32_0 : i32, i32
  }
  func.func @transform_6(%arg0: i32) -> i32 {
    %c0_i32 = arith.constant 0 : i32
    %c0_i32_0 = arith.constant 0 : i32
    return %c0_i32 : i32
  }
  func.func @transform_7(%arg0: i32) -> (i32, i32) {
    %c0_i32 = arith.constant 0 : i32
    %c0_i32_0 = arith.constant 0 : i32
    return %c0_i32, %arg0 : i32, i32
  }
}

</mosaic_0001>

<llo_original>
// kernel: tpu_custom_call.1
$region0: #{tpu_custom_call.1}
  #allocation0 [shape = 'u32[]', space=smem, size = 0x4, offset = 0x4, fixed_abs, tag = 'smem constant byte address 0x4 - core index']
  #allocation1 [shape = 'u32[144,128]{1,0:T(1,128)}', space=vmem, size = 0x12000, scoped, tag = 'internal scratch']
  #allocation2 [shape = 'f32[1]{0:T(128)S(6)}', space=smem, size = 0x200, scoped, tag = 'scoped memory for tpu_custom_call.1']
  %s0 = inlined_call_operand.hbm [shape: f32[8,32], index: 0, kind: input, shape index: {}]
  %s1 = inlined_call_operand.hbm [shape: bf16[32,128], index: 1, kind: input, shape index: {}]
  %s2 = inlined_call_operand.vmem [shape: f32[1,128], index: 2, kind: input, shape index: {}]
  %s3 = inlined_call_operand.hbm [shape: bf16[128,128], index: 3, kind: input, shape index: {}]
  %s4 = inlined_call_operand.vmem [shape: f32[1,128], index: 4, kind: input, shape index: {}]
  %s5 = inlined_call_operand.vmem [shape: bf16[1,128], index: 5, kind: input, shape index: {}]
  %s6 = inlined_call_operand.<no memory space> [shape: f32[1], index: 6, kind: input, shape index: {}]
  %s7 = inlined_call_operand.hbm [shape: f32[1,8], index: 7, kind: output, shape index: {}]
  %s8 = sld [smem:[#allocation0]]
  $region50: #{tpu_custom_call.1} parent=0
    _
  %s10 = ssub.s32 1, %s8
  %s11 = scalar_select 0, %s10, %s8
  %12 = sst [smem:[#allocation2]] %s6
  $region1: #{tpu_custom_call.1} parent=0
    #allocation3 [shape = 'u8[65536]{0}', space=vmem, size = 0x10000, scoped, tag = 'input window, operand 0, single buffered']
    #allocation4 [shape = 's32[1]{0}', space=sflag, size = 0x4, scoped, tag = 'scoped memory for tpu_custom_call.1']
    #allocation5 [shape = 's32[1]{0}', space=sflag, size = 0x4, scoped, tag = 'scoped memory for tpu_custom_call.1']
    #allocation6 [shape = 'u8[8192]{0}', space=vmem, size = 0x2000, scoped, tag = 'input window, operand 1, single buffered']
    #allocation7 [shape = 's32[1]{0}', space=sflag, size = 0x4, scoped, tag = 'scoped memory for tpu_custom_call.1']
    #allocation8 [shape = 'u8[32768]{0}', space=vmem, size = 0x8000, scoped, tag = 'input window, operand 3, single buffered']
    #allocation9 [shape = 'u8[512]{0}', space=vmem, size = 0x400, scoped, tag = 'output window, operand 0, single buffered']
    %13 = vsyncpa [#allocation4], 0
    %14 = vsyncpa [#allocation7], 0
    %15 = vsyncpa [#allocation5], 0
    // Predicated region
    $region2: #{tpu_custom_call.1} parent=1 // pred_check
      _
    $region3: #{tpu_custom_call.1} parent=1 // pred_check_branch
      %17 = sbr.rel (0) target = $region5
    $region4: #{tpu_custom_call.1} parent=1 // pred_region
      %s19 = ssub.s32 2048, 128
      %20 = vsyncadd [#allocation4], %s19
      %s21 = sshll.u32 [#allocation3], 4
      %s22 = int_to_ptr.vmem [resolvable:$true] %s21
      %27 = dma.hbm_to_vmem [thread:$0]  %s0, 128, %s22, [#allocation4], 128, 128, 8
    $region5: #{tpu_custom_call.1} parent=1 // pred_fallthru
      _
    // Predicated region
    $region6: #{tpu_custom_call.1} parent=1 // pred_check
      _
    $region7: #{tpu_custom_call.1} parent=1 // pred_check_branch
      %29 = sbr.rel (0) target = $region9
    $region8: #{tpu_custom_call.1} parent=1 // pred_region
      %s31 = ssub.s32 256, 256
      %32 = vsyncadd [#allocation7], %s31
      %s33 = sshll.u32 [#allocation6], 4
      %s34 = int_to_ptr.vmem [resolvable:$true] %s33
      %39 = dma.hbm_to_vmem [thread:$0]  %s1, 256, %s34, [#allocation7], 64, 64, 4
    $region9: #{tpu_custom_call.1} parent=1 // pred_fallthru
      _
    // Predicated region
    $region10: #{tpu_custom_call.1} parent=1 // pred_check
      _
    $region11: #{tpu_custom_call.1} parent=1 // pred_check_branch
      %41 = sbr.rel (0) target = $region13
    $region12: #{tpu_custom_call.1} parent=1 // pred_region
      _
    $region13: #{tpu_custom_call.1} parent=1 // pred_fallthru
      _
    // Predicated region
    $region14: #{tpu_custom_call.1} parent=1 // pred_check
      _
    $region15: #{tpu_custom_call.1} parent=1 // pred_check_branch
      %43 = sbr.rel (0) target = $region17
    $region16: #{tpu_custom_call.1} parent=1 // pred_region
      %s45 = ssub.s32 1024, 1024
      %46 = vsyncadd [#allocation7], %s45
      %s47 = sshll.u32 [#allocation8], 4
      %s48 = int_to_ptr.vmem [resolvable:$true] %s47
      %53 = dma.hbm_to_vmem [thread:$0]  %s3, 1024, %s48, [#allocation7], 64, 64, 4
    $region17: #{tpu_custom_call.1} parent=1 // pred_fallthru
      _
    // Predicated region
    $region18: #{tpu_custom_call.1} parent=1 // pred_check
      _
    $region19: #{tpu_custom_call.1} parent=1 // pred_check_branch
      %55 = sbr.rel (0) target = $region21
    $region20: #{tpu_custom_call.1} parent=1 // pred_region
      _
    $region21: #{tpu_custom_call.1} parent=1 // pred_fallthru
      _
    // Predicated region
    $region22: #{tpu_custom_call.1} parent=1 // pred_check
      _
    $region23: #{tpu_custom_call.1} parent=1 // pred_check_branch
      %57 = sbr.rel (0) target = $region25
    $region24: #{tpu_custom_call.1} parent=1 // pred_region
      _
    $region25: #{tpu_custom_call.1} parent=1 // pred_fallthru
      _
    // Predicated region
    $region26: #{tpu_custom_call.1} parent=1 // pred_check
      _
    $region27: #{tpu_custom_call.1} parent=1 // pred_check_branch
      %59 = sbr.rel (0) target = $region29
    $region28: #{tpu_custom_call.1} parent=1 // pred_region
      _
    $region29: #{tpu_custom_call.1} parent=1 // pred_fallthru
      _
    // Predicated region
    $region30: #{tpu_custom_call.1} parent=1 // pred_check
      _
    $region31: #{tpu_custom_call.1} parent=1 // pred_check_branch
      %61 = sbr.rel (0) target = $region33
    $region32: #{tpu_custom_call.1} parent=1 // pred_region
      %62 = dma.done [#allocation4], 2048
    $region33: #{tpu_custom_call.1} parent=1 // pred_fallthru
      _
    // Predicated region
    $region34: #{tpu_custom_call.1} parent=1 // pred_check
      _
    $region35: #{tpu_custom_call.1} parent=1 // pred_check_branch
      %64 = sbr.rel (0) target = $region37
    $region36: #{tpu_custom_call.1} parent=1 // pred_region
      %65 = dma.done [#allocation7], 256
    $region37: #{tpu_custom_call.1} parent=1 // pred_fallthru
      _
    // Predicated region
    $region38: #{tpu_custom_call.1} parent=1 // pred_check
      _
    $region39: #{tpu_custom_call.1} parent=1 // pred_check_branch
      %67 = sbr.rel (0) target = $region41
    $region40: #{tpu_custom_call.1} parent=1 // pred_region
      %68 = dma.done [#allocation7], 1024
    $region41: #{tpu_custom_call.1} parent=1 // pred_fallthru
      _
    %v70 = vld [vmem:[#allocation3] sm:$0xff]
    %v71 = vld [vmem:[#allocation3 + $0x8] sm:$0xff]
    %v72 = vld [vmem:[#allocation3 + $0x10] sm:$0xff]
    %v73 = vld [vmem:[#allocation3 + $0x18] sm:$0xff]
    %v74 = vld [vmem:[#allocation3 + $0x20] sm:$0xff]
    %v75 = vld [vmem:[#allocation3 + $0x28] sm:$0xff]
    %v76 = vld [vmem:[#allocation3 + $0x30] sm:$0xff]
    %v77 = vld [vmem:[#allocation3 + $0x38] sm:$0xff]
    %v78 = vld [vmem:[#allocation3 + $0x40] sm:$0xff]
    %v79 = vld [vmem:[#allocation3 + $0x48] sm:$0xff]
    %v80 = vld [vmem:[#allocation3 + $0x50] sm:$0xff]
    %v81 = vld [vmem:[#allocation3 + $0x58] sm:$0xff]
    %v82 = vld [vmem:[#allocation3 + $0x60] sm:$0xff]
    %v83 = vld [vmem:[#allocation3 + $0x68] sm:$0xff]
    %v84 = vld [vmem:[#allocation3 + $0x70] sm:$0xff]
    %v85 = vld [vmem:[#allocation3 + $0x78] sm:$0xff]
    %v86 = vpack.c.bf16 %v71, %v70
    %v87 = vpack.c.bf16 %v73, %v72
    %v88 = vpack.c.bf16 %v75, %v74
    %v89 = vpack.c.bf16 %v77, %v76
    %v90 = vpack.c.bf16 %v79, %v78
    %v91 = vpack.c.bf16 %v81, %v80
    %v92 = vpack.c.bf16 %v83, %v82
    %v93 = vpack.c.bf16 %v85, %v84
    %v94 = vld [vmem:[%s2] sm:$0x1]
    %v95 = vld [vmem:[%s4] sm:$0x1]
    %s96 = sld [smem:[#allocation2]]
    %v97 = vld [vmem:[#allocation6] sm:$0xf]
    %v98 = vld [vmem:[#allocation6 + $0x4] sm:$0xf]
    %v99 = vld [vmem:[#allocation6 + $0x8] sm:$0xf]
    %v100 = vld [vmem:[#allocation6 + $0xc] sm:$0xf]
    %v102 = vlaneseq
    %v103 = vshrl.u32 %v102, 7
    %v104 = vsub.s32 0, %v103
    %v105 = vrot.slane %v94, %v104
    %v111 = vunpack.c.l.b16 %v97
    %v112 = vunpack.c.l.b16 %v98
    %v113 = vunpack.c.l.b16 %v99
    %v114 = vunpack.c.l.b16 %v100
    %v115 = vpack.c.b16 %v112, %v111
    %v116 = vpack.c.b16 %v114, %v113
    %vm119 = vcmask 261120
    %v121 = vsel %vm119, %v86, 0
    %v124 = vsel %vm119, %v87, 0
    %v127 = vsel %vm119, %v88, 0
    %v130 = vsel %vm119, %v89, 0
    %v133 = vsel %vm119, %v90, 0
    %v136 = vsel %vm119, %v91, 0
    %v139 = vsel %vm119, %v92, 0
    %v142 = vsel %vm119, %v93, 0
    %144 = vmatprep.subr.bf16.mxu0 0
    %145 = vmatpush1.bf16.msra.mxu0 %v115
    %146 = vmatprep.subr.bf16.mxu0 0
    %147 = vmatpush1.bf16.msra.mxu0 %v116
    %148 = vmatprep.subr.bf16.mxu0 0
    %149 = vmatpush1.bf16.msra.mxu0 0
    %150 = vmatprep.subr.bf16.mxu0 0
    %151 = vmatpush1.bf16.msra.mxu0 0
    %152 = vmatprep.subr.bf16.mxu0 0
    %153 = vmatpush1.bf16.msra.mxu0 0
    %154 = vmatprep.subr.bf16.mxu0 0
    %155 = vmatpush1.bf16.msra.mxu0 0
    %156 = vmatprep.subr.bf16.mxu0 0
    %157 = vmatpush1.bf16.msra.mxu0 0
    %158 = vmatprep.subr.bf16.mxu0 0
    %159 = vmatpush1.bf16.msra.mxu0 0
    %160 = vmatprep.subr.bf16.mxu0 0
    %161 = vmatpush1.bf16.msra.mxu0 0
    %162 = vmatprep.subr.bf16.mxu0 0
    %163 = vmatpush1.bf16.msra.mxu0 0
    %164 = vmatprep.subr.bf16.mxu0 0
    %165 = vmatpush1.bf16.msra.mxu0 0
    %166 = vmatprep.subr.bf16.mxu0 0
    %167 = vmatpush1.bf16.msra.mxu0 0
    %168 = vmatprep.subr.bf16.mxu0 0
    %169 = vmatpush1.bf16.msra.mxu0 0
    %170 = vmatprep.subr.bf16.mxu0 0
    %171 = vmatpush1.bf16.msra.mxu0 0
    %172 = vmatprep.subr.bf16.mxu0 0
    %173 = vmatpush1.bf16.msra.mxu0 0
    %174 = vmatprep.subr.bf16.mxu0 0
    %175 = vmatpush1.bf16.msra.mxu0 0
    %176 = vmatprep.mubr.bf16.mxu0 0
    %177 = vmatmul.mubr.bf16.gmra.mrb[0].mxu0 %v121
    %v178 = vpop.f32.mrb[0].mxu0
    %v179 = vadd.f32 %v105, %v178
    %v180 = vpop.f32.mrb[0].mxu0
    %v181 = vpop.f32.mrb[0].mxu0
    %v182 = vadd.f32 %v105, %v181
    %v183 = vpop.f32.mrb[0].mxu0
    %184 = vmatprep.mubr.bf16.mxu0 0
    %185 = vmatmul.mubr.bf16.gmra.mrb[0].mxu0 %v124
    %v186 = vpop.f32.mrb[0].mxu0
    %v187 = vadd.f32 %v105, %v186
    %v188 = vpop.f32.mrb[0].mxu0
    %v189 = vpop.f32.mrb[0].mxu0
    %v190 = vadd.f32 %v105, %v189
    %v191 = vpop.f32.mrb[0].mxu0
    %192 = vmatprep.mubr.bf16.mxu0 0
    %193 = vmatmul.mubr.bf16.gmra.mrb[0].mxu0 %v127
    %v194 = vpop.f32.mrb[0].mxu0
    %v195 = vadd.f32 %v105, %v194
    %v196 = vpop.f32.mrb[0].mxu0
    %v197 = vpop.f32.mrb[0].mxu0
    %v198 = vadd.f32 %v105, %v197
    %v199 = vpop.f32.mrb[0].mxu0
    %200 = vmatprep.mubr.bf16.mxu0 0
    %201 = vmatmul.mubr.bf16.gmra.mrb[0].mxu0 %v130
    %v202 = vpop.f32.mrb[0].mxu0
    %v203 = vadd.f32 %v105, %v202
    %v204 = vpop.f32.mrb[0].mxu0
    %v205 = vpop.f32.mrb[0].mxu0
    %v206 = vadd.f32 %v105, %v205
    %v207 = vpop.f32.mrb[0].mxu0
    %208 = vmatprep.mubr.bf16.mxu0 0
    %209 = vmatmul.mubr.bf16.gmra.mrb[0].mxu0 %v133
    %v210 = vpop.f32.mrb[0].mxu0
    %v211 = vadd.f32 %v105, %v210
    %v212 = vpop.f32.mrb[0].mxu0
    %v213 = vpop.f32.mrb[0].mxu0
    %v214 = vadd.f32 %v105, %v213
    %v215 = vpop.f32.mrb[0].mxu0
    %216 = vmatprep.mubr.bf16.mxu0 0
    %217 = vmatmul.mubr.bf16.gmra.mrb[0].mxu0 %v136
    %v218 = vpop.f32.mrb[0].mxu0
    %v219 = vadd.f32 %v105, %v218
    %v220 = vpop.f32.mrb[0].mxu0
    %v221 = vpop.f32.mrb[0].mxu0
    %v222 = vadd.f32 %v105, %v221
    %v223 = vpop.f32.mrb[0].mxu0
    %224 = vmatprep.mubr.bf16.mxu0 0
    %225 = vmatmul.mubr.bf16.gmra.mrb[0].mxu0 %v139
    %v226 = vpop.f32.mrb[0].mxu0
    %v227 = vadd.f32 %v105, %v226
    %v228 = vpop.f32.mrb[0].mxu0
    %v229 = vpop.f32.mrb[0].mxu0
    %v230 = vadd.f32 %v105, %v229
    %v231 = vpop.f32.mrb[0].mxu0
    %232 = vmatprep.mubr.bf16.mxu0 0
    %233 = vmatmul.mubr.bf16.gmra.mrb[0].mxu0 %v142
    %v234 = vpop.f32.mrb[0].mxu0
    %v235 = vadd.f32 %v105, %v234
    %v236 = vpop.f32.mrb[0].mxu0
    %v237 = vpop.f32.mrb[0].mxu0
    %v238 = vadd.f32 %v105, %v237
    %v239 = vpop.f32.mrb[0].mxu0
    %240 = vdwg.mxu0
    %v241 = vmax.f32 %v179, 0.0
    %v242 = vmax.f32 %v182, 0.0
    %v243 = vmax.f32 %v187, 0.0
    %v244 = vmax.f32 %v190, 0.0
    %v245 = vmax.f32 %v195, 0.0
    %v246 = vmax.f32 %v198, 0.0
    %v247 = vmax.f32 %v203, 0.0
    %v248 = vmax.f32 %v206, 0.0
    %v249 = vmax.f32 %v211, 0.0
    %v250 = vmax.f32 %v214, 0.0
    %v251 = vmax.f32 %v219, 0.0
    %v252 = vmax.f32 %v222, 0.0
    %v253 = vmax.f32 %v227, 0.0
    %v254 = vmax.f32 %v230, 0.0
    %v255 = vmax.f32 %v235, 0.0
    %v256 = vmax.f32 %v238, 0.0
    %v257 = vpack.c.bf16 %v242, %v241
    %v258 = vpack.c.bf16 %v244, %v243
    %v259 = vpack.c.bf16 %v246, %v245
    %v260 = vpack.c.bf16 %v248, %v247
    %v261 = vpack.c.bf16 %v250, %v249
    %v262 = vpack.c.bf16 %v252, %v251
    %v263 = vpack.c.bf16 %v254, %v253
    %v264 = vpack.c.bf16 %v256, %v255
    %v265 = vld [vmem:[#allocation8] sm:$0xf]
    %v266 = vld [vmem:[#allocation8 + $0x4] sm:$0xf]
    %v267 = vld [vmem:[#allocation8 + $0x8] sm:$0xf]
    %v268 = vld [vmem:[#allocation8 + $0xc] sm:$0xf]
    %v269 = vld [vmem:[#allocation8 + $0x10] sm:$0xf]
    %v270 = vld [vmem:[#allocation8 + $0x14] sm:$0xf]
    %v271 = vld [vmem:[#allocation8 + $0x18] sm:$0xf]
    %v272 = vld [vmem:[#allocation8 + $0x1c] sm:$0xf]
    %v273 = vld [vmem:[#allocation8 + $0x20] sm:$0xf]
    %v274 = vld [vmem:[#allocation8 + $0x24] sm:$0xf]
    %v275 = vld [vmem:[#allocation8 + $0x28] sm:$0xf]
    %v276 = vld [vmem:[#allocation8 + $0x2c] sm:$0xf]
    %v277 = vld [vmem:[#allocation8 + $0x30] sm:$0xf]
    %v278 = vld [vmem:[#allocation8 + $0x34] sm:$0xf]
    %v279 = vld [vmem:[#allocation8 + $0x38] sm:$0xf]
    %v280 = vld [vmem:[#allocation8 + $0x3c] sm:$0xf]
    %v282 = vlaneseq
    %v283 = vshrl.u32 %v282, 7
    %v284 = vsub.s32 0, %v283
    %v285 = vrot.slane %v95, %v284
    %v303 = vunpack.c.l.b16 %v265
    %v304 = vunpack.c.l.b16 %v266
    %v305 = vunpack.c.l.b16 %v267
    %v306 = vunpack.c.l.b16 %v268
    %v307 = vunpack.c.l.b16 %v269
    %v308 = vunpack.c.l.b16 %v270
    %v309 = vunpack.c.l.b16 %v271
    %v310 = vunpack.c.l.b16 %v272
    %v311 = vunpack.c.l.b16 %v273
    %v312 = vunpack.c.l.b16 %v274
    %v313 = vunpack.c.l.b16 %v275
    %v314 = vunpack.c.l.b16 %v276
    %v315 = vunpack.c.l.b16 %v277
    %v316 = vunpack.c.l.b16 %v278
    %v317 = vunpack.c.l.b16 %v279
    %v318 = vunpack.c.l.b16 %v280
    %v319 = vpack.c.b16 %v304, %v303
    %v320 = vpack.c.b16 %v306, %v305
    %v321 = vpack.c.b16 %v308, %v307
    %v322 = vpack.c.b16 %v310, %v309
    %v323 = vpack.c.b16 %v312, %v311
    %v324 = vpack.c.b16 %v314, %v313
    %v325 = vpack.c.b16 %v316, %v315
    %v326 = vpack.c.b16 %v318, %v317
    %335 = vmatprep.subr.bf16.mxu0 0
    %336 = vmatpush1.bf16.msra.mxu0 %v319
    %337 = vmatprep.subr.bf16.mxu0 0
    %338 = vmatpush1.bf16.msra.mxu0 %v320
    %339 = vmatprep.subr.bf16.mxu0 0
    %340 = vmatpush1.bf16.msra.mxu0 %v321
    %341 = vmatprep.subr.bf16.mxu0 0
    %342 = vmatpush1.bf16.msra.mxu0 %v322
    %343 = vmatprep.subr.bf16.mxu0 0
    %344 = vmatpush1.bf16.msra.mxu0 %v323
    %345 = vmatprep.subr.bf16.mxu0 0
    %346 = vmatpush1.bf16.msra.mxu0 %v324
    %347 = vmatprep.subr.bf16.mxu0 0
    %348 = vmatpush1.bf16.msra.mxu0 %v325
    %349 = vmatprep.subr.bf16.mxu0 0
    %350 = vmatpush1.bf16.msra.mxu0 %v326
    %351 = vmatprep.subr.bf16.mxu0 0
    %352 = vmatpush1.bf16.msra.mxu0 0
    %353 = vmatprep.subr.bf16.mxu0 0
    %354 = vmatpush1.bf16.msra.mxu0 0
    %355 = vmatprep.subr.bf16.mxu0 0
    %356 = vmatpush1.bf16.msra.mxu0 0
    %357 = vmatprep.subr.bf16.mxu0 0
    %358 = vmatpush1.bf16.msra.mxu0 0
    %359 = vmatprep.subr.bf16.mxu0 0
    %360 = vmatpush1.bf16.msra.mxu0 0
    %361 = vmatprep.subr.bf16.mxu0 0
    %362 = vmatpush1.bf16.msra.mxu0 0
    %363 = vmatprep.subr.bf16.mxu0 0
    %364 = vmatpush1.bf16.msra.mxu0 0
    %365 = vmatprep.subr.bf16.mxu0 0
    %366 = vmatpush1.bf16.msra.mxu0 0
    %367 = vmatprep.mubr.bf16.mxu0 0
    %368 = vmatmul.mubr.bf16.gmra.mrb[0].mxu0 %v257
    %v369 = vpop.f32.mrb[0].mxu0
    %v370 = vadd.f32 %v285, %v369
    %v371 = vpop.f32.mrb[0].mxu0
    %v372 = vpop.f32.mrb[0].mxu0
    %v373 = vadd.f32 %v285, %v372
    %v374 = vpop.f32.mrb[0].mxu0
    %375 = vmatprep.mubr.bf16.mxu0 0
    %376 = vmatmul.mubr.bf16.gmra.mrb[0].mxu0 %v258
    %v377 = vpop.f32.mrb[0].mxu0
    %v378 = vadd.f32 %v285, %v377
    %v379 = vpop.f32.mrb[0].mxu0
    %v380 = vpop.f32.mrb[0].mxu0
    %v381 = vadd.f32 %v285, %v380
    %v382 = vpop.f32.mrb[0].mxu0
    %383 = vmatprep.mubr.bf16.mxu0 0
    %384 = vmatmul.mubr.bf16.gmra.mrb[0].mxu0 %v259
    %v385 = vpop.f32.mrb[0].mxu0
    %v386 = vadd.f32 %v285, %v385
    %v387 = vpop.f32.mrb[0].mxu0
    %v388 = vpop.f32.mrb[0].mxu0
    %v389 = vadd.f32 %v285, %v388
    %v390 = vpop.f32.mrb[0].mxu0
    %391 = vmatprep.mubr.bf16.mxu0 0
    %392 = vmatmul.mubr.bf16.gmra.mrb[0].mxu0 %v260
    %v393 = vpop.f32.mrb[0].mxu0
    %v394 = vadd.f32 %v285, %v393
    %v395 = vpop.f32.mrb[0].mxu0
    %v396 = vpop.f32.mrb[0].mxu0
    %v397 = vadd.f32 %v285, %v396
    %v398 = vpop.f32.mrb[0].mxu0
    %399 = vmatprep.mubr.bf16.mxu0 0
    %400 = vmatmul.mubr.bf16.gmra.mrb[0].mxu0 %v261
    %v401 = vpop.f32.mrb[0].mxu0
    %v402 = vadd.f32 %v285, %v401
    %v403 = vpop.f32.mrb[0].mxu0
    %v404 = vpop.f32.mrb[0].mxu0
    %v405 = vadd.f32 %v285, %v404
    %v406 = vpop.f32.mrb[0].mxu0
    %407 = vmatprep.mubr.bf16.mxu0 0
    %408 = vmatmul.mubr.bf16.gmra.mrb[0].mxu0 %v262
    %v409 = vpop.f32.mrb[0].mxu0
    %v410 = vadd.f32 %v285, %v409
    %v411 = vpop.f32.mrb[0].mxu0
    %v412 = vpop.f32.mrb[0].mxu0
    %v413 = vadd.f32 %v285, %v412
    %v414 = vpop.f32.mrb[0].mxu0
    %415 = vmatprep.mubr.bf16.mxu0 0
    %416 = vmatmul.mubr.bf16.gmra.mrb[0].mxu0 %v263
    %v417 = vpop.f32.mrb[0].mxu0
    %v418 = vadd.f32 %v285, %v417
    %v419 = vpop.f32.mrb[0].mxu0
    %v420 = vpop.f32.mrb[0].mxu0
    %v421 = vadd.f32 %v285, %v420
    %v422 = vpop.f32.mrb[0].mxu0
    %423 = vmatprep.mubr.bf16.mxu0 0
    %424 = vmatmul.mubr.bf16.gmra.mrb[0].mxu0 %v264
    %v425 = vpop.f32.mrb[0].mxu0
    %v426 = vadd.f32 %v285, %v425
    %v427 = vpop.f32.mrb[0].mxu0
    %v428 = vpop.f32.mrb[0].mxu0
    %v429 = vadd.f32 %v285, %v428
    %v430 = vpop.f32.mrb[0].mxu0
    %431 = vdwg.mxu0
    %v432 = vmax.f32 %v370, 0.0
    %v433 = vmax.f32 %v373, 0.0
    %v434 = vmax.f32 %v378, 0.0
    %v435 = vmax.f32 %v381, 0.0
    %v436 = vmax.f32 %v386, 0.0
    %v437 = vmax.f32 %v389, 0.0
    %v438 = vmax.f32 %v394, 0.0
    %v439 = vmax.f32 %v397, 0.0
    %v440 = vmax.f32 %v402, 0.0
    %v441 = vmax.f32 %v405, 0.0
    %v442 = vmax.f32 %v410, 0.0
    %v443 = vmax.f32 %v413, 0.0
    %v444 = vmax.f32 %v418, 0.0
    %v445 = vmax.f32 %v421, 0.0
    %v446 = vmax.f32 %v426, 0.0
    %v447 = vmax.f32 %v429, 0.0
    %v448 = vld [vmem:[%s5] sm:$0x1]
    %v449 = vpack.c.bf16 %v433, %v432
    %v450 = vpack.c.bf16 %v435, %v434
    %v451 = vpack.c.bf16 %v437, %v436
    %v452 = vpack.c.bf16 %v439, %v438
    %v453 = vpack.c.bf16 %v441, %v440
    %v454 = vpack.c.bf16 %v443, %v442
    %v455 = vpack.c.bf16 %v445, %v444
    %v456 = vpack.c.bf16 %v447, %v446
    %v457 = vstv %s96
    %458 = vmatprep.subr.bf16.mxu0 0
    %459 = vmatpush1.bf16.xpose.msra.mxu0 %v449
    %460 = vmatprep.subr.bf16.mxu0 0
    %461 = vmatpush1.bf16.xpose.msra.mxu0 %v450
    %462 = vmatprep.subr.bf16.mxu0 0
    %463 = vmatpush1.bf16.xpose.msra.mxu0 %v451
    %464 = vmatprep.subr.bf16.mxu0 0
    %465 = vmatpush1.bf16.xpose.msra.mxu0 %v452
    %466 = vmatprep.subr.bf16.mxu0 0
    %467 = vmatpush1.bf16.xpose.msra.mxu0 %v453
    %468 = vmatprep.subr.bf16.mxu0 0
    %469 = vmatpush1.bf16.xpose.msra.mxu0 %v454
    %470 = vmatprep.subr.bf16.mxu0 0
    %471 = vmatpush1.bf16.xpose.msra.mxu0 %v455
    %472 = vmatprep.subr.bf16.mxu0 0
    %473 = vmatpush1.bf16.xpose.msra.mxu0 %v456
    %474 = vmatprep.subr.bf16.mxu0 0
    %475 = vmatpush1.bf16.xpose.msra.mxu0 0
    %476 = vmatprep.subr.bf16.mxu0 0
    %477 = vmatpush1.bf16.xpose.msra.mxu0 0
    %478 = vmatprep.subr.bf16.mxu0 0
    %479 = vmatpush1.bf16.xpose.msra.mxu0 0
    %480 = vmatprep.subr.bf16.mxu0 0
    %481 = vmatpush1.bf16.xpose.msra.mxu0 0
    %482 = vmatprep.subr.bf16.mxu0 0
    %483 = vmatpush1.bf16.xpose.msra.mxu0 0
    %484 = vmatprep.subr.bf16.mxu0 0
    %485 = vmatpush1.bf16.xpose.msra.mxu0 0
    %486 = vmatprep.subr.bf16.mxu0 0
    %487 = vmatpush1.bf16.xpose.msra.mxu0 0
    %488 = vmatprep.subr.bf16.mxu0 0
    %489 = vmatpush1.bf16.xpose.msra.mxu0 0
    %490 = vmatprep.mubr.bf16.mxu0 0
    %491 = vmatmul.mubr.bf16.gmra.mrb[0].mxu0 %v448
    %v492 = vpop.f32.mrb[0].mxu0
    %v493 = vadd.f32 %v457, %v492
    %v494 = vpop.f32.mrb[0].mxu0
    %v495 = vpop.f32.mrb[0].mxu0
    %v496 = vpop.f32.mrb[0].mxu0
    %497 = vdwg.mxu0
    %498 = vst [vmem:[#allocation9] sm:$0x1] %v493
    // Predicated region
    $region42: #{tpu_custom_call.1} parent=1 // pred_check
      _
    $region43: #{tpu_custom_call.1} parent=1 // pred_check_branch
      %500 = sbr.rel (0) target = $region45
    $region44: #{tpu_custom_call.1} parent=1 // pred_region
      %s502 = ssub.s32 16, 16
      %503 = vsyncadd [#allocation5], %s502
      %s505 = sshll.u32 [#allocation9], 4
      %s506 = int_to_ptr.vmem [resolvable:$true] %s505
      %508 = dma.vmem_to_hbm [thread:$0]  %s506, 16, %s7, [#allocation5]
    $region45: #{tpu_custom_call.1} parent=1 // pred_fallthru
      _
    // Predicated region
    $region46: #{tpu_custom_call.1} parent=1 // pred_check
      _
    $region47: #{tpu_custom_call.1} parent=1 // pred_check_branch
      %510 = sbr.rel (0) target = $region49
    $region48: #{tpu_custom_call.1} parent=1 // pred_region
      %511 = dma.done [#allocation5], 16
    $region49: #{tpu_custom_call.1} parent=1 // pred_fallthru
      _
    %512 = vsyncpa [#allocation4], 1
    %513 = vsyncpa [#allocation7], 1
    %514 = vsyncpa [#allocation5], 1

</llo_original>
